<compile_context>
chip_gen: v7x
topology: tpu7x:2x2x1
jax: 0.10.0
libtpu: 0.0.40
codegen_flags: <defaults>
</compile_context>

<pallas_src>
import functools

import jax
import jax.numpy as jnp
from jax.experimental import pallas as pl
from jax.experimental.pallas import tpu as pltpu


def _embed_kernel(tq, t_pad, ids_ref, tok_ref, pos_ref, out_ref, gather_ref):
    # ids_ref    : (B * t_pad,) int32 in SMEM (scalar prefetch), flattened ids
    # tok_ref    : (V, D)  full token table, VMEM resident
    # pos_ref    : (tq, D) positional rows for this sequence tile
    # out_ref    : (1, tq, D) output slab for (batch b, tile tt)
    # gather_ref : (tq, D) VMEM scratch holding the gathered token rows
    tt = pl.program_id(0)
    b = pl.program_id(1)
    base = b * t_pad + tt * tq

    # Gather TQ rows from the resident token table, 8 rows per fori_loop step
    # (manual unroll keeps the loop body wide for the LLO scheduler while the
    # trip count stays a small, known value).
    def gather_block(i, carry):
        q0 = pl.multiple_of(i * 8, 8)
        for r in range(8):
            q = q0 + r
            tok_id = ids_ref[base + q]                        # scalar from SMEM
            gather_ref[pl.ds(q, 1), :] = tok_ref[pl.ds(tok_id, 1), :]
        return carry

    jax.lax.fori_loop(0, tq // 8, gather_block, 0, unroll=(tq <= 64))

    # Single dense add + dense (tq, D) store — lane/sublane-dense, unmasked vst.
    out_ref[0] = gather_ref[...] + pos_ref[...]


def embeddings_forward(x, tok_table, pos_table, *, tq=None):
    """x: (B, T) int token ids -> (B, T, D) embeddings (token + positional)."""
    B, T = x.shape
    V, D = tok_table.shape
    Tmax, D2 = pos_table.shape
    assert D == D2 and T <= Tmax

    # Clamp ids so an out-of-range token id cannot read a wrong row.
    ids = jnp.clip(x.astype(jnp.int32), 0, V - 1)

    # Sequence tile size: sublane-dense (multiple of 8), capped at 128 tokens/step.
    if tq is None:
        tq = min(128, max(8, ((T + 7) // 8) * 8))
    t_pad = ((T + tq - 1) // tq) * tq
    n_tiles = t_pad // tq

    if t_pad != T:
        ids = jnp.pad(ids, ((0, 0), (0, t_pad - T)))
    # Flatten to 1-D for compact SMEM scalar-prefetch storage.
    ids_flat = ids.reshape(B * t_pad)

    pos = pos_table
    if pos.shape[0] < t_pad:
        pos = jnp.pad(pos, ((0, t_pad - pos.shape[0]), (0, 0)))

    # VMEM budget (resident table is the big item). For huge vocabularies a
    # manual-DMA row-gather path (memory_space=pl.ANY + make_async_copy) would
    # be needed instead of keeping the table VMEM-resident.
    # TODO(synk): add a manual-DMA multi-buffered row-gather path for vocab
    #             tables too large to keep VMEM-resident.
    elem = jnp.dtype(tok_table.dtype).itemsize
    vmem_bytes = (
        2 * V * D * elem          # resident token table (pipeline buffers)
        + 2 * tq * D * elem       # positional tile double-buffer
        + 2 * tq * D * elem       # output tile double-buffer
        + tq * D * elem           # gather scratch
    )
    compiler_kwargs = dict(dimension_semantics=("parallel", "parallel"))
    if vmem_bytes > 16 * 1024 * 1024:
        # Raise the scoped VMEM limit (v5e default is 16 MiB); cap well under
        # v7x's 64 MiB physical VMEM.
        compiler_kwargs["vmem_limit_bytes"] = min(
            int(vmem_bytes * 5 // 4), 48 * 1024 * 1024
        )

    grid_spec = pltpu.PrefetchScalarGridSpec(
        num_scalar_prefetch=1,
        # B innermost: tok (constant) and pos (tile-indexed) blocks stay
        # resident across the batch loop -> one pos fetch per sequence tile.
        grid=(n_tiles, B),
        in_specs=[
            # Whole token table resident in VMEM (constant block index).
            pl.BlockSpec((V, D), lambda tt, b, ids: (0, 0)),
            # One (tq, D) slab of positional rows per sequence tile.
            pl.BlockSpec((tq, D), lambda tt, b, ids: (tt, 0)),
        ],
        out_specs=pl.BlockSpec((1, tq, D), lambda tt, b, ids: (b, tt, 0)),
        scratch_shapes=[pltpu.VMEM((tq, D), tok_table.dtype)],
    )

    out = pl.pallas_call(
        functools.partial(_embed_kernel, tq, t_pad),
        out_shape=jax.ShapeDtypeStruct((B, t_pad, D), tok_table.dtype),
        grid_spec=grid_spec,
        compiler_params=pltpu.CompilerParams(**compiler_kwargs),
    )(ids_flat, tok_table, pos)

    if t_pad != T:
        out = out[:, :T, :]
    return out


if __name__ == "__main__":
    # Config (small, consistent with the module): vocab_size, n_embd, sequence_length
    vocab_size = 64
    n_embd = 128
    sequence_length = 8
    batch_size = 2

    key = jax.random.PRNGKey(0)
    k_tok, k_pos, k_x = jax.random.split(key, 3)

    # nn.Embedding default init ~ N(0, 1)
    tok_table = jax.random.normal(k_tok, (vocab_size, n_embd), dtype=jnp.float32)
    pos_table = jax.random.normal(k_pos, (sequence_length, n_embd), dtype=jnp.float32)

    x = jax.random.randint(
        k_x, (batch_size, sequence_length), 0, vocab_size, dtype=jnp.int32
    )

    out = embeddings_forward(x, tok_table, pos_table)
    out = jax.block_until_ready(out)

    # Reference check (pure JAX) to validate semantics.
    ref = tok_table[x] + pos_table[jnp.arange(sequence_length)][None, :, :]
    assert out.shape == (batch_size, sequence_length, n_embd)
    assert jnp.allclose(out, ref, atol=1e-6), "mismatch vs reference"

    print("KERNEL_OK")
</pallas_src>

<mosaic_0001>
module attributes {stable_mosaic.version = 11 : i64} {
  func.func @_embed_kernel(%arg0: i32, %arg1: i32, %arg2: memref<16xi32, #tpu.memory_space<smem>>, %arg3: memref<64x128xf32, #tpu.memory_space<vmem>>, %arg4: memref<8x128xf32, #tpu.memory_space<vmem>>, %arg5: memref<1x8x128xf32, #tpu.memory_space<vmem>>, %arg6: memref<8x128xf32, #tpu.memory_space<vmem>>) attributes {dimension_semantics = [#tpu.dimension_semantics<parallel>, #tpu.dimension_semantics<parallel>], iteration_bounds = array<i64: 1, 2>, scalar_prefetch = 1 : i64, scratch_operands = 1 : i64, tpu.core_type = #tpu.core_type<tc>, window_params = [{pipeline_mode = #tpu.pipeline_mode<synchronous>, transform_indices = @transform_0, window_bounds = array<i64: 64, 128>}, {transform_indices = @transform_1, window_bounds = array<i64: 8, 128>}, {transform_indices = @transform_2, window_bounds = array<i64: 1, 8, 128>}]} {
    %c8_i32 = arith.constant 8 : i32
    %0 = arith.muli %arg1, %c8_i32 : i32
    %c8_i32_0 = arith.constant 8 : i32
    %1 = arith.muli %arg0, %c8_i32_0 : i32
    %2 = arith.addi %0, %1 : i32
    %c0_i32 = arith.constant 0 : i32
    %c8_i32_1 = arith.constant 8 : i32
    %3 = arith.muli %c0_i32, %c8_i32_1 : i32
    %4 = tpu.assume_multiple %3, 8 : i32
    %c0_i32_2 = arith.constant 0 : i32
    %5 = arith.addi %4, %c0_i32_2 : i32
    %6 = arith.addi %2, %5 : i32
    %7 = arith.index_cast %6 : i32 to index
    %8 = memref.load %arg2[%7] : memref<16xi32, #tpu.memory_space<smem>>
    %9 = arith.index_cast %8 : i32 to index
    %c0 = arith.constant 0 : index
    %10 = vector.load %arg3[%9, %c0] : memref<64x128xf32, #tpu.memory_space<vmem>>, vector<1x128xf32>
    %11 = arith.index_cast %5 : i32 to index
    %c0_3 = arith.constant 0 : index
    %12 = vector.load %arg6[%11, %c0_3] : memref<8x128xf32, #tpu.memory_space<vmem>>, vector<1x128xf32>
    tpu.vector_store %arg6[%11, %c0_3], %10 {strides = array<i32>} : memref<8x128xf32, #tpu.memory_space<vmem>>, vector<1x128xf32>,
    %c1_i32 = arith.constant 1 : i32
    %13 = arith.addi %4, %c1_i32 : i32
    %14 = arith.addi %2, %13 : i32
    %15 = arith.index_cast %14 : i32 to index
    %16 = memref.load %arg2[%15] : memref<16xi32, #tpu.memory_space<smem>>
    %17 = arith.index_cast %16 : i32 to index
    %c0_4 = arith.constant 0 : index
    %18 = vector.load %arg3[%17, %c0_4] : memref<64x128xf32, #tpu.memory_space<vmem>>, vector<1x128xf32>
    %19 = arith.index_cast %13 : i32 to index
    %c0_5 = arith.constant 0 : index
    %20 = vector.load %arg6[%19, %c0_5] : memref<8x128xf32, #tpu.memory_space<vmem>>, vector<1x128xf32>
    tpu.vector_store %arg6[%19, %c0_5], %18 {strides = array<i32>} : memref<8x128xf32, #tpu.memory_space<vmem>>, vector<1x128xf32>,
    %c2_i32 = arith.constant 2 : i32
    %21 = arith.addi %4, %c2_i32 : i32
    %22 = arith.addi %2, %21 : i32
    %23 = arith.index_cast %22 : i32 to index
    %24 = memref.load %arg2[%23] : memref<16xi32, #tpu.memory_space<smem>>
    %25 = arith.index_cast %24 : i32 to index
    %c0_6 = arith.constant 0 : index
    %26 = vector.load %arg3[%25, %c0_6] : memref<64x128xf32, #tpu.memory_space<vmem>>, vector<1x128xf32>
    %27 = arith.index_cast %21 : i32 to index
    %c0_7 = arith.constant 0 : index
    %28 = vector.load %arg6[%27, %c0_7] : memref<8x128xf32, #tpu.memory_space<vmem>>, vector<1x128xf32>
    tpu.vector_store %arg6[%27, %c0_7], %26 {strides = array<i32>} : memref<8x128xf32, #tpu.memory_space<vmem>>, vector<1x128xf32>,
    %c3_i32 = arith.constant 3 : i32
    %29 = arith.addi %4, %c3_i32 : i32
    %30 = arith.addi %2, %29 : i32
    %31 = arith.index_cast %30 : i32 to index
    %32 = memref.load %arg2[%31] : memref<16xi32, #tpu.memory_space<smem>>
    %33 = arith.index_cast %32 : i32 to index
    %c0_8 = arith.constant 0 : index
    %34 = vector.load %arg3[%33, %c0_8] : memref<64x128xf32, #tpu.memory_space<vmem>>, vector<1x128xf32>
    %35 = arith.index_cast %29 : i32 to index
    %c0_9 = arith.constant 0 : index
    %36 = vector.load %arg6[%35, %c0_9] : memref<8x128xf32, #tpu.memory_space<vmem>>, vector<1x128xf32>
    tpu.vector_store %arg6[%35, %c0_9], %34 {strides = array<i32>} : memref<8x128xf32, #tpu.memory_space<vmem>>, vector<1x128xf32>,
    %c4_i32 = arith.constant 4 : i32
    %37 = arith.addi %4, %c4_i32 : i32
    %38 = arith.addi %2, %37 : i32
    %39 = arith.index_cast %38 : i32 to index
    %40 = memref.load %arg2[%39] : memref<16xi32, #tpu.memory_space<smem>>
    %41 = arith.index_cast %40 : i32 to index
    %c0_10 = arith.constant 0 : index
    %42 = vector.load %arg3[%41, %c0_10] : memref<64x128xf32, #tpu.memory_space<vmem>>, vector<1x128xf32>
    %43 = arith.index_cast %37 : i32 to index
    %c0_11 = arith.constant 0 : index
    %44 = vector.load %arg6[%43, %c0_11] : memref<8x128xf32, #tpu.memory_space<vmem>>, vector<1x128xf32>
    tpu.vector_store %arg6[%43, %c0_11], %42 {strides = array<i32>} : memref<8x128xf32, #tpu.memory_space<vmem>>, vector<1x128xf32>,
    %c5_i32 = arith.constant 5 : i32
    %45 = arith.addi %4, %c5_i32 : i32
    %46 = arith.addi %2, %45 : i32
    %47 = arith.index_cast %46 : i32 to index
    %48 = memref.load %arg2[%47] : memref<16xi32, #tpu.memory_space<smem>>
    %49 = arith.index_cast %48 : i32 to index
    %c0_12 = arith.constant 0 : index
    %50 = vector.load %arg3[%49, %c0_12] : memref<64x128xf32, #tpu.memory_space<vmem>>, vector<1x128xf32>
    %51 = arith.index_cast %45 : i32 to index
    %c0_13 = arith.constant 0 : index
    %52 = vector.load %arg6[%51, %c0_13] : memref<8x128xf32, #tpu.memory_space<vmem>>, vector<1x128xf32>
    tpu.vector_store %arg6[%51, %c0_13], %50 {strides = array<i32>} : memref<8x128xf32, #tpu.memory_space<vmem>>, vector<1x128xf32>,
    %c6_i32 = arith.constant 6 : i32
    %53 = arith.addi %4, %c6_i32 : i32
    %54 = arith.addi %2, %53 : i32
    %55 = arith.index_cast %54 : i32 to index
    %56 = memref.load %arg2[%55] : memref<16xi32, #tpu.memory_space<smem>>
    %57 = arith.index_cast %56 : i32 to index
    %c0_14 = arith.constant 0 : index
    %58 = vector.load %arg3[%57, %c0_14] : memref<64x128xf32, #tpu.memory_space<vmem>>, vector<1x128xf32>
    %59 = arith.index_cast %53 : i32 to index
    %c0_15 = arith.constant 0 : index
    %60 = vector.load %arg6[%59, %c0_15] : memref<8x128xf32, #tpu.memory_space<vmem>>, vector<1x128xf32>
    tpu.vector_store %arg6[%59, %c0_15], %58 {strides = array<i32>} : memref<8x128xf32, #tpu.memory_space<vmem>>, vector<1x128xf32>,
    %c7_i32 = arith.constant 7 : i32
    %61 = arith.addi %4, %c7_i32 : i32
    %62 = arith.addi %2, %61 : i32
    %63 = arith.index_cast %62 : i32 to index
    %64 = memref.load %arg2[%63] : memref<16xi32, #tpu.memory_space<smem>>
    %65 = arith.index_cast %64 : i32 to index
    %c0_16 = arith.constant 0 : index
    %66 = vector.load %arg3[%65, %c0_16] : memref<64x128xf32, #tpu.memory_space<vmem>>, vector<1x128xf32>
    %67 = arith.index_cast %61 : i32 to index
    %c0_17 = arith.constant 0 : index
    %68 = vector.load %arg6[%67, %c0_17] : memref<8x128xf32, #tpu.memory_space<vmem>>, vector<1x128xf32>
    tpu.vector_store %arg6[%67, %c0_17], %66 {strides = array<i32>} : memref<8x128xf32, #tpu.memory_space<vmem>>, vector<1x128xf32>,
    %c1_i32_18 = arith.constant 1 : i32
    %c0_19 = arith.constant 0 : index
    %c0_20 = arith.constant 0 : index
    %69 = vector.load %arg6[%c0_19, %c0_20] : memref<8x128xf32, #tpu.memory_space<vmem>>, vector<8x128xf32>
    %c0_21 = arith.constant 0 : index
    %c0_22 = arith.constant 0 : index
    %70 = vector.load %arg4[%c0_21, %c0_22] : memref<8x128xf32, #tpu.memory_space<vmem>>, vector<8x128xf32>
    %71 = arith.addf %69, %70 : vector<8x128xf32>
    %c0_23 = arith.constant 0 : index
    %c0_24 = arith.constant 0 : index
    %c0_25 = arith.constant 0 : index
    %72 = vector.load %arg5[%c0_23, %c0_24, %c0_25] : memref<1x8x128xf32, #tpu.memory_space<vmem>>, vector<1x8x128xf32>
    %73 = vector.shape_cast %72 : vector<1x8x128xf32> to vector<8x128xf32>
    %74 = vector.shape_cast %71 : vector<8x128xf32> to vector<1x8x128xf32>
    tpu.vector_store %arg5[%c0_23, %c0_24, %c0_25], %74 {strides = array<i32>} : memref<1x8x128xf32, #tpu.memory_space<vmem>>, vector<1x8x128xf32>,
    return
  }
  func.func @transform_0(%arg0: i32, %arg1: i32, %arg2: memref<16xi32, #tpu.memory_space<smem>>) -> (i32, i32) {
    %c0_i32 = arith.constant 0 : i32
    %c0_i32_0 = arith.constant 0 : i32
    %c0_i32_1 = arith.constant 0 : i32
    return %c0_i32, %c0_i32_0 : i32, i32
  }
  func.func @transform_1(%arg0: i32, %arg1: i32, %arg2: memref<16xi32, #tpu.memory_space<smem>>) -> (i32, i32) {
    %c0_i32 = arith.constant 0 : i32
    %c0_i32_0 = arith.constant 0 : i32
    return %arg0, %c0_i32 : i32, i32
  }
  func.func @transform_2(%arg0: i32, %arg1: i32, %arg2: memref<16xi32, #tpu.memory_space<smem>>) -> (i32, i32, i32) {
    %c0_i32 = arith.constant 0 : i32
    %c0_i32_0 = arith.constant 0 : i32
    return %arg1, %arg0, %c0_i32 : i32, i32, i32
  }
}

</mosaic_0001>

<llo_original>
// kernel: tpu_custom_call.1
$region0: #{tpu_custom_call.1}
  #allocation0 [shape = 'u32[]', space=smem, size = 0x4, offset = 0x4, fixed_abs, tag = 'smem constant byte address 0x4 - core index']
  #allocation1 [shape = 'u32[144,128]{1,0:T(1,128)}', space=vmem, size = 0x12000, scoped, tag = 'internal scratch']
  #allocation2 [shape = 'f32[8,128]{1,0:T(8,128)}', space=vmem, size = 0x1000, scoped, tag = 'scratch operand']
  #allocation3 [shape = 's32[1]{0}', space=sflag, size = 0x4, scoped, tag = 'scoped memory for tpu_custom_call.1']
  #allocation4 [shape = 'u8[512]{0}', space=smem, size = 0x200, scoped, tag = 'prefetched SMEM operand 0']
  %s0 = inlined_call_operand.hbm [shape: s32[16], index: 0, kind: input, shape index: {}]
  %s1 = inlined_call_operand.hbm [shape: f32[64,128], index: 1, kind: input, shape index: {}]
  %s2 = inlined_call_operand.hbm [shape: f32[8,128], index: 2, kind: input, shape index: {}]
  %s3 = inlined_call_operand.hbm [shape: f32[2,8,128], index: 3, kind: output, shape index: {}]
  %s4 = sld [smem:[#allocation0]]
  $region49: #{tpu_custom_call.1} parent=0
    _
  %s6 = ssub.s32 1, %s4
  %s7 = scalar_select 0, %s6, %s4
  %9 = dma.hbm_to_smem %s0, 16, [#allocation4], [#allocation3]
  %10 = dma.done [#allocation3], 16
  %11 = sfence
  $region1: #{tpu_custom_call.1} parent=0
    #allocation5 [shape = 'u8[32768]{0}', space=vmem, size = 0x8000, scoped, tag = 'input window, operand 1, single buffered']
    #allocation6 [shape = 's32[2]{0}', space=sflag, size = 0x8, scoped, tag = 'scoped memory for tpu_custom_call.1']
    #allocation7 [shape = 's32[2]{0}', space=sflag, size = 0x8, scoped, tag = 'scoped memory for tpu_custom_call.1']
    #allocation8 [shape = 'u8[4096]{0}', space=vmem, size = 0x1000, scoped, tag = 'input window, operand 2, single buffered']
    #allocation9 [shape = 's32[1]{0}', space=sflag, size = 0x4, scoped, tag = 'scoped memory for tpu_custom_call.1']
    #allocation10 [shape = 'u8[8192]{0}', space=vmem, size = 0x2000, scoped, tag = 'output window, operand 0']
    %12 = vsyncpa [#allocation6], 0
    %13 = vsyncpa [#allocation9], 0
    %14 = vsyncpa [#allocation7], 0
    %s15 = scalar_lea.sflag [#allocation7], 1
    %16 = vsyncpa %s15, 0
    loop: start=0, step=1, limit=4
    $region2: #{tpu_custom_call.1} parent=1 // loop_pre_header
      _
    $region3: #{tpu_custom_call.1} parent=1 // loop_header
      %s18 = sphi 0, %s22
      %p19 = scmp.ge.s32.totalorder %s18, 4
      %s25 = sphi 0, %s37
      %s26 = sphi 0, %s33
      %s27 = sphi 0, %s25
      %s28 = sphi 0, %s26
      %s29 = sphi 0, %s27
      %s30 = sphi 0, %s28
      %s38 = sphi 0, %s38
      %s40 = sphi 0, %s38
      %s41 = sphi 0, %s40
      %s55 = sphi 0, %s41
      %s61 = sphi 0, %s63
      %s64 = sphi 0, %s61
      %s65 = sphi 0, %s64
      %s81 = sphi 0, %s65
      %s89 = sphi 0, %s91
      %s92 = sphi 0, %s89
      %s93 = sphi 0, %s92
      %s109 = sphi 0, %s93
    $region4: #{tpu_custom_call.1} parent=1 // loop_header_branch
      %21 = sbr.rel (%p19) target = $region8
    $region5: #{tpu_custom_call.1} parent=1 // loop_body
      %s23 = ssub.s32 %s18, 1
      %s24 = ssub.s32 %s18, 2
      %s31 = sadd.s32 1, %s26
      %p32 = scmp.ge.s32.totalorder %s31, 2
      %s33 = scalar_select %p32, 0, %s31
      %s34 = sadd.s32 1, %s25
      %s35 = scalar_select %p32, %s34, %s25
      %p36 = scmp.ge.s32.totalorder %s35, 1
      %s37 = scalar_select %p36, 0, %s35
      %s39 = sadd.s32 %s38, 1
      %p42 = scmp.eq.s32.totalorder %s18, 1
      %p43 = scmp.ne.s32.totalorder %s38, %s40
      %p44 = scmp.eq.s32.totalorder %s18, 0
      %p45 = por %p43, %p44
      %p46 = scmp.ne.s32.totalorder %s38, %s40
      %p47 = scmp.eq.s32.totalorder %s23, 1
      %p48 = por %p46, %p47
      %p49 = scmp.ne.s32.totalorder %s40, %s41
      %p50 = scmp.eq.s32.totalorder %s23, 0
      %p51 = por %p49, %p50
      %p52 = scmp.ne.s32.totalorder %s40, %s41
      %p53 = scmp.eq.s32.totalorder %s24, 1
      %p54 = por %p52, %p53
      %p56 = scmp.ne.s32.totalorder %s41, %s55
      %p57 = scmp.eq.s32.totalorder %s24, 0
      %p58 = por %p56, %p57
      %s59 = ssub.s32 %s25, %s37
      %p60 = scmp.eq.s32.totalorder %s59, 0
      %s62 = sadd.s32 %s61, 1
      %s63 = scalar_select %p60, %s61, %s62
      %p66 = pneg %p60
      %p67 = scmp.eq.s32.totalorder %s18, 1
      %p68 = por %p66, %p67
      %p69 = scmp.ne.s32.totalorder %s61, %s64
      %p70 = scmp.eq.s32.totalorder %s18, 0
      %p71 = por %p69, %p70
      %p72 = scmp.ne.s32.totalorder %s61, %s64
      %p73 = scmp.eq.s32.totalorder %s23, 1
      %p74 = por %p72, %p73
      %p75 = scmp.ne.s32.totalorder %s64, %s65
      %p76 = scmp.eq.s32.totalorder %s23, 0
      %p77 = por %p75, %p76
      %p78 = scmp.ne.s32.totalorder %s64, %s65
      %p79 = scmp.eq.s32.totalorder %s24, 1
      %p80 = por %p78, %p79
      %p82 = scmp.ne.s32.totalorder %s65, %s81
      %p83 = scmp.eq.s32.totalorder %s24, 0
      %p84 = por %p82, %p83
      %s85 = ssub.s32 %s26, %s33
      %s86 = ssub.s32 %s25, %s37
      %s87 = sor.u32 %s85, %s86
      %p88 = scmp.eq.s32.totalorder %s87, 0
      %s90 = sadd.s32 %s89, 1
      %s91 = scalar_select %p88, %s89, %s90
      %p94 = pneg %p88
      %p95 = scmp.eq.s32.totalorder %s18, 1
      %p96 = por %p94, %p95
      %p97 = scmp.ne.s32.totalorder %s89, %s92
      %p98 = scmp.eq.s32.totalorder %s18, 0
      %p99 = por %p97, %p98
      %p100 = scmp.ne.s32.totalorder %s89, %s92
      %p101 = scmp.eq.s32.totalorder %s23, 1
      %p102 = por %p100, %p101
      %p103 = scmp.ne.s32.totalorder %s92, %s93
      %p104 = scmp.eq.s32.totalorder %s23, 0
      %p105 = por %p103, %p104
      %p106 = scmp.ne.s32.totalorder %s92, %s93
      %p107 = scmp.eq.s32.totalorder %s24, 1
      %p108 = por %p106, %p107
      %p110 = scmp.ne.s32.totalorder %s93, %s109
      %p111 = scmp.eq.s32.totalorder %s24, 0
      %p112 = por %p110, %p111
      %p113 = scmp.le.s32.totalorder 1, %s18
      %p114 = scmp.lt.s32.totalorder %s18, 3
      %p115 = pnand %p113, %p114
      %p116 = pneg %p115
      // Predicated region
      $region9: #{tpu_custom_call.1} parent=5 // pred_check
        _
      $region10: #{tpu_custom_call.1} parent=5 // pred_check_branch
        %118 = sbr.rel (%p115) target = $region12
      $region11: #{tpu_custom_call.1} parent=5 // pred_region
        %s119 = ssub.s32 %s18, 1
        // Predicated region
        $region13: #{tpu_custom_call.1} parent=11 // pred_check
          %p120 = pneg %p51
        $region14: #{tpu_custom_call.1} parent=11 // pred_check_branch
          %122 = sbr.rel (%p120) target = $region16
        $region15: #{tpu_custom_call.1} parent=11 // pred_region
          %s124 = ssub.s32 1024, 1024
          %125 = vsyncadd [#allocation6], %s124
          %s126 = sshll.u32 [#allocation5], 4
          %s127 = int_to_ptr.vmem [resolvable:$true] %s126
          %132 = dma.hbm_to_vmem [thread:$0]  %s1, 1024, %s127, [#allocation6], 128, 128, 8
        $region16: #{tpu_custom_call.1} parent=11 // pred_fallthru
          _
        // Predicated region
        $region17: #{tpu_custom_call.1} parent=11 // pred_check
          %p133 = pneg %p77
        $region18: #{tpu_custom_call.1} parent=11 // pred_check_branch
          %135 = sbr.rel (%p133) target = $region20
        $region19: #{tpu_custom_call.1} parent=11 // pred_region
          %s137 = ssub.s32 128, 128
          %138 = vsyncadd [#allocation9], %s137
          %s139 = smul.addr %s27, 128
          %s140 = scalar_lea.hbm %s2, %s139
          %s142 = sshll.u32 [#allocation8], 4
          %s143 = int_to_ptr.vmem [resolvable:$true] %s142
          %145 = dma.hbm_to_vmem [thread:$0]  %s140, 128, %s143, [#allocation9]
        $region20: #{tpu_custom_call.1} parent=11 // pred_fallthru
          _
      $region12: #{tpu_custom_call.1} parent=5 // pred_fallthru
        _
      %p146 = scmp.lt.s32.totalorder %s18, 2
      // Predicated region
      $region21: #{tpu_custom_call.1} parent=5 // pred_check
        %p147 = pneg %p146
      $region22: #{tpu_custom_call.1} parent=5 // pred_check_branch
        %149 = sbr.rel (%p147) target = $region24
      $region23: #{tpu_custom_call.1} parent=5 // pred_region
        _
      $region24: #{tpu_custom_call.1} parent=5 // pred_fallthru
        _
      %p150 = scmp.le.s32.totalorder 1, %s18
      %p151 = scmp.lt.s32.totalorder %s18, 3
      %p152 = pnand %p150, %p151
      %p153 = pneg %p152
      // Predicated region
      $region25: #{tpu_custom_call.1} parent=5 // pred_check
        _
      $region26: #{tpu_custom_call.1} parent=5 // pred_check_branch
        %155 = sbr.rel (%p152) target = $region28
      $region27: #{tpu_custom_call.1} parent=5 // pred_region
        %s156 = ssub.s32 %s18, 1
        // Predicated region
        $region29: #{tpu_custom_call.1} parent=27 // pred_check
          %p157 = pneg %p51
        $region30: #{tpu_custom_call.1} parent=27 // pred_check_branch
          %159 = sbr.rel (%p157) target = $region32
        $region31: #{tpu_custom_call.1} parent=27 // pred_region
          %160 = dma.done [#allocation6], 1024
        $region32: #{tpu_custom_call.1} parent=27 // pred_fallthru
          _
        // Predicated region
        $region33: #{tpu_custom_call.1} parent=27 // pred_check
          %p161 = pneg %p77
        $region34: #{tpu_custom_call.1} parent=27 // pred_check_branch
          %163 = sbr.rel (%p161) target = $region36
        $region35: #{tpu_custom_call.1} parent=27 // pred_region
          %164 = dma.done [#allocation9], 128
        $region36: #{tpu_custom_call.1} parent=27 // pred_fallthru
          _
        %p165 = pneg %p51
        %p166 = pneg %p48
        %p167 = pneg %p77
        %p168 = pneg %p74
        %p169 = pneg %p105
        %p170 = pneg %p102
        %s171 = sand.u32 %s92, 1
        %s172 = scalar_lea.sflag [#allocation7], %s171
        %s173 = sand.u32 %s92, 1
        %s174 = smul.addr %s173, 8
        %s175 = scalar_lea.vmem [#allocation10], %s174
        %s176 = smul.u32 %s28, 8
        %s177 = smul.u32 %s27, 8
        %s178 = sadd.s32 %s176, %s177
        %s179 = sadd.s32 %s178, 0
        %s180 = sld [smem:[#allocation4 + %s179]]
        %s181 = scalar_lea.vmem [#allocation5], %s180
        %v182 = vld [vmem:[%s181] sm:$0x1]
        %183 = vst [vmem:[#allocation2] sm:$0x1] %v182
        %s184 = sadd.s32 0, 1
        %s185 = sadd.s32 %s178, %s184
        %s186 = sld [smem:[#allocation4 + %s185]]
        %s187 = scalar_lea.vmem [#allocation5], %s186
        %v188 = vld [vmem:[%s187] sm:$0x1]
        %s189 = scalar_lea.vmem [#allocation2], %s184
        %190 = vst [vmem:[%s189] sm:$0x1] %v188
        %s191 = sadd.s32 0, 2
        %s192 = sadd.s32 %s178, %s191
        %s193 = sld [smem:[#allocation4 + %s192]]
        %s194 = scalar_lea.vmem [#allocation5], %s193
        %v195 = vld [vmem:[%s194] sm:$0x1]
        %s196 = scalar_lea.vmem [#allocation2], %s191
        %197 = vst [vmem:[%s196] sm:$0x1] %v195
        %s198 = sadd.s32 0, 3
        %s199 = sadd.s32 %s178, %s198
        %s200 = sld [smem:[#allocation4 + %s199]]
        %s201 = scalar_lea.vmem [#allocation5], %s200
        %v202 = vld [vmem:[%s201] sm:$0x1]
        %s203 = scalar_lea.vmem [#allocation2], %s198
        %204 = vst [vmem:[%s203] sm:$0x1] %v202
        %s205 = sadd.s32 0, 4
        %s206 = sadd.s32 %s178, %s205
        %s207 = sld [smem:[#allocation4 + %s206]]
        %s208 = scalar_lea.vmem [#allocation5], %s207
        %v209 = vld [vmem:[%s208] sm:$0x1]
        %s210 = scalar_lea.vmem [#allocation2], %s205
        %211 = vst [vmem:[%s210] sm:$0x1] %v209
        %s212 = sadd.s32 0, 5
        %s213 = sadd.s32 %s178, %s212
        %s214 = sld [smem:[#allocation4 + %s213]]
        %s215 = scalar_lea.vmem [#allocation5], %s214
        %v216 = vld [vmem:[%s215] sm:$0x1]
        %s217 = scalar_lea.vmem [#allocation2], %s212
        %218 = vst [vmem:[%s217] sm:$0x1] %v216
        %s219 = sadd.s32 0, 6
        %s220 = sadd.s32 %s178, %s219
        %s221 = sld [smem:[#allocation4 + %s220]]
        %s222 = scalar_lea.vmem [#allocation5], %s221
        %v223 = vld [vmem:[%s222] sm:$0x1]
        %s224 = scalar_lea.vmem [#allocation2], %s219
        %225 = vst [vmem:[%s224] sm:$0x1] %v223
        %s226 = sadd.s32 0, 7
        %s227 = sadd.s32 %s178, %s226
        %s228 = sld [smem:[#allocation4 + %s227]]
        %s229 = scalar_lea.vmem [#allocation5], %s228
        %v230 = vld [vmem:[%s229] sm:$0x1]
        %s231 = scalar_lea.vmem [#allocation2], %s226
        %232 = vst [vmem:[%s231] sm:$0x1] %v230
        %v233 = vld [vmem:[#allocation2] sm:$0xff]
        %v234 = vld [vmem:[#allocation8] sm:$0xff]
        %v235 = vadd.f32 %v233, %v234
        %236 = vst [vmem:[%s175] sm:$0xff] %v235
        %s237 = sand.u32 %s92, 1
        %s238 = scalar_lea.sflag [#allocation7], %s237
        %s239 = sand.u32 %s92, 1
        %s240 = smul.addr %s239, 8
        %s241 = scalar_lea.vmem [#allocation10], %s240
        // Predicated region
        $region37: #{tpu_custom_call.1} parent=27 // pred_check
          %p242 = pneg %p102
        $region38: #{tpu_custom_call.1} parent=27 // pred_check_branch
          %244 = sbr.rel (%p242) target = $region40
        $region39: #{tpu_custom_call.1} parent=27 // pred_region
          %s246 = ssub.s32 128, 128
          %247 = vsyncadd %s238, %s246
          %s248 = sadd.s32 %s27, %s28
          %s249 = smul.addr %s248, 128
          %s250 = scalar_lea.hbm %s3, %s249
          %s252 = sshll.u32 %s241, 4
          %s253 = int_to_ptr.vmem [resolvable:$true] %s252
          %255 = dma.vmem_to_hbm [thread:$0]  %s253, 128, %s250, %s238
        $region40: #{tpu_custom_call.1} parent=27 // pred_fallthru
          _
      $region28: #{tpu_custom_call.1} parent=5 // pred_fallthru
        _
      %p256 = scmp.le.s32.totalorder 2, %s18
      // Predicated region
      $region41: #{tpu_custom_call.1} parent=5 // pred_check
        %p257 = pneg %p256
      $region42: #{tpu_custom_call.1} parent=5 // pred_check_branch
        %259 = sbr.rel (%p257) target = $region44
      $region43: #{tpu_custom_call.1} parent=5 // pred_region
        %s260 = ssub.s32 %s18, 2
        // Predicated region
        $region45: #{tpu_custom_call.1} parent=43 // pred_check
          %p261 = pneg %p108
        $region46: #{tpu_custom_call.1} parent=43 // pred_check_branch
          %263 = sbr.rel (%p261) target = $region48
        $region47: #{tpu_custom_call.1} parent=43 // pred_region
          %s264 = sand.u32 %s93, 1
          %s265 = scalar_lea.sflag [#allocation7], %s264
          %s266 = sand.u32 %s93, 1
          %s267 = smul.addr %s266, 8
          %s268 = scalar_lea.vmem [#allocation10], %s267
          %269 = dma.done %s265, 128
        $region48: #{tpu_custom_call.1} parent=43 // pred_fallthru
          _
      $region44: #{tpu_custom_call.1} parent=5 // pred_fallthru
        _
    $region6: #{tpu_custom_call.1} parent=1 // loop_footer
      %s22 = sadd.s32 1, %s18
    $region7: #{tpu_custom_call.1} parent=1 // loop_footer_branch
      %17 = sbr.rel target = $region3
    $region8: #{tpu_custom_call.1} parent=1 // loop_exit
      _
    %270 = vsyncpa [#allocation6], 1
    %s271 = scalar_lea.sflag [#allocation6], 1
    %272 = vsyncpa %s271, 1
    %273 = vsyncpa [#allocation9], 1
    %274 = vsyncpa [#allocation7], 1
    %s275 = scalar_lea.sflag [#allocation7], 1
    %276 = vsyncpa %s275, 1

</llo_original>
